<compile_context>
chip_gen: v5e
topology: v5e:2x2
jax: 0.10.0
libtpu: 0.0.40
codegen_flags: <defaults>
</compile_context>

<pallas_src>
import functools

import jax
import jax.numpy as jnp
from jax import lax
from jax.experimental import pallas as pl
from jax.experimental.pallas import tpu as pltpu


def _rc_conv_kernel(p_ref, w_ref, b_ref, o_ref, *, activated):
    """Single grid step: conv-as-matmul over a block of batch rows.

    p_ref: (NB, K, HWo)   im2col patches, K = Cin*KH*KW (cin-major), MXU dtype
    w_ref: (Cout, K)      weights flattened to match the patch K ordering
    b_ref: (Cout, 1)      bias, f32
    o_ref: (NB, Cout, HWo) flattened-NCHW output block
    """
    nb = p_ref.shape[0]
    w = w_ref[...]
    b = b_ref[...]
    # Static-unrolled loop over the (small) batch block: each iteration is one
    # canonical (Cout, K) x (K, HWo) MXU matmul with HWo lane-dense; each
    # result lands directly in NCHW order, so no relayout/transpose is needed.
    for i in range(nb):
        acc = jnp.dot(w, p_ref[i], preferred_element_type=jnp.float32)
        out = acc + b                      # (Cout, HWo) f32 epilogue
        if activated:
            out = jnp.maximum(out, 0.0)
        o_ref[i] = out.astype(o_ref.dtype)


def rc_forward(x_nchw, weight, bias, *, pad_size=1, activated=True,
               mxu_dtype=jnp.bfloat16, batch_block=None):
    """Forward pass matching the PyTorch RC module.

    x_nchw: (N, Cin, H, W)       float32
    weight: (Cout, Cin, KH, KW)  (PyTorch Conv2d layout)
    bias:   (Cout,)
    returns (N, Cout, H_out, W_out)
    """
    N, Cin, H, W = x_nchw.shape
    Cout, _, KH, KW = weight.shape

    # --- wrapper glue (tiny at demo shapes, fused by XLA) -------------------
    # Reflection pad in NCHW (matches nn.ReflectionPad2d).
    x_pad = jnp.pad(
        x_nchw,
        ((0, 0), (0, 0), (pad_size, pad_size), (pad_size, pad_size)),
        mode="reflect")
    Hp, Wp = H + 2 * pad_size, W + 2 * pad_size
    Ho, Wo = Hp - KH + 1, Wp - KW + 1
    HWo = Ho * Wo
    K = Cin * KH * KW

    # Lane-dense im2col: 9 shifted windows stacked along a tap axis, flattened
    # to (N, K, HWo) with K ordered (cin, kh, kw) — i.e. exactly the flatten
    # order of the PyTorch OIHW weight.  Cast to the MXU dtype once here so
    # the kernel DMA moves half the bytes and does zero VPU casts.
    taps = [x_pad[:, :, kh:kh + Ho, kw:kw + Wo].reshape(N, Cin, HWo)
            for kh in range(KH) for kw in range(KW)]
    patches = (jnp.stack(taps, axis=2)            # (N, Cin, KH*KW, HWo)
               .reshape(N, K, HWo)
               .astype(mxu_dtype))

    # Weight (Cout, Cin, KH, KW) -> (Cout, K): same (cin, kh, kw) K ordering.
    w_mat = weight.reshape(Cout, K).astype(mxu_dtype)
    b_col = bias.reshape(Cout, 1).astype(jnp.float32)

    # Grid: a single step covering the whole batch at demo shapes.  For large
    # production batches pass batch_block < N to get a multi-step "parallel"
    # batch axis (feeds both v7x TensorCores).
    if batch_block is None:
        batch_block = N
    nb = batch_block
    assert N % nb == 0, "batch_block must divide N"
    grid = (N // nb,)
    semantics = ("arbitrary",) if grid[0] == 1 else ("parallel",)

    kernel = functools.partial(_rc_conv_kernel, activated=activated)

    out_flat = pl.pallas_call(
        kernel,
        out_shape=jax.ShapeDtypeStruct((N, Cout, HWo), x_nchw.dtype),
        grid_spec=pltpu.PrefetchScalarGridSpec(
            num_scalar_prefetch=0,
            grid=grid,
            in_specs=[
                pl.BlockSpec((nb, K, HWo), lambda i: (i, 0, 0)),
                pl.BlockSpec((Cout, K), lambda i: (0, 0)),
                pl.BlockSpec((Cout, 1), lambda i: (0, 0)),
            ],
            out_specs=pl.BlockSpec((nb, Cout, HWo), lambda i: (i, 0, 0)),
        ),
        compiler_params=pltpu.CompilerParams(
            dimension_semantics=semantics),
    )(patches, w_mat, b_col)

    # (N, Cout, HWo) -> (N, Cout, Ho, Wo): contiguous reshape, no data movement.
    return out_flat.reshape(N, Cout, Ho, Wo)


def _reference_forward(x_nchw, weight, bias, *, pad_size=1, activated=True):
    """Pure-JAX f32 reference (ReflectionPad2d + Conv2d + ReLU), NCHW."""
    xp = jnp.pad(x_nchw,
                 ((0, 0), (0, 0), (pad_size, pad_size), (pad_size, pad_size)),
                 mode="reflect")
    out = lax.conv_general_dilated(
        xp, weight, window_strides=(1, 1), padding="VALID",
        dimension_numbers=("NCHW", "OIHW", "NCHW"))
    out = out + bias.reshape(1, -1, 1, 1)
    if activated:
        out = jnp.maximum(out, 0.0)
    return out


if __name__ == "__main__":
    key = jax.random.PRNGKey(0)
    kx, kw, kb = jax.random.split(key, 3)

    # Small shapes consistent with the module: batch=2, Cin=4, Cout=8, 16x16.
    N, Cin, Cout, H, W, Ksz = 2, 4, 8, 16, 16, 3

    x = jax.random.normal(kx, (N, Cin, H, W), dtype=jnp.float32)

    # Deterministic parameter init (mimicking Conv2d's uniform fan-in bound).
    fan_in = Cin * Ksz * Ksz
    bound = 1.0 / (fan_in ** 0.5)
    weight = jax.random.uniform(kw, (Cout, Cin, Ksz, Ksz),
                                minval=-bound, maxval=bound, dtype=jnp.float32)
    bias = jax.random.uniform(kb, (Cout,),
                              minval=-bound, maxval=bound, dtype=jnp.float32)

    out = rc_forward(x, weight, bias, pad_size=1, activated=True)
    out = jax.block_until_ready(out)

    ref = _reference_forward(x, weight, bias, pad_size=1, activated=True)
    assert out.shape == (N, Cout, H, W)
    # bf16 MXU operands (f32 accumulation) -> compare at bf16-appropriate tol.
    assert jnp.allclose(out, ref, atol=3e-2, rtol=3e-2)

    print("KERNEL_OK")
</pallas_src>

<mosaic_0001>
module attributes {stable_mosaic.version = 11 : i64} {
  func.func @_rc_conv_kernel(%arg0: i32, %arg1: memref<2x36x256xbf16, #tpu.memory_space<vmem>>, %arg2: memref<8x36xbf16, #tpu.memory_space<vmem>>, %arg3: memref<8x1xf32, #tpu.memory_space<vmem>>, %arg4: memref<2x8x256xf32, #tpu.memory_space<vmem>>) attributes {dimension_semantics = [#tpu.dimension_semantics<arbitrary>], iteration_bounds = array<i64: 1>, scalar_prefetch = 0 : i64, scratch_operands = 0 : i64, tpu.core_type = #tpu.core_type<tc>, window_params = [{transform_indices = @transform_0, window_bounds = array<i64: 2, 36, 256>}, {pipeline_mode = #tpu.pipeline_mode<synchronous>, transform_indices = @transform_1, window_bounds = array<i64: 8, 36>}, {pipeline_mode = #tpu.pipeline_mode<synchronous>, transform_indices = @transform_2, window_bounds = array<i64: 8, 1>}, {transform_indices = @transform_3, window_bounds = array<i64: 2, 8, 256>}]} {
    %c0 = arith.constant 0 : index
    %c0_0 = arith.constant 0 : index
    %0 = vector.load %arg2[%c0, %c0_0] : memref<8x36xbf16, #tpu.memory_space<vmem>>, vector<8x36xbf16>
    %c0_1 = arith.constant 0 : index
    %c0_2 = arith.constant 0 : index
    %1 = vector.load %arg3[%c0_1, %c0_2] : memref<8x1xf32, #tpu.memory_space<vmem>>, vector<8x1xf32>
    %c0_3 = arith.constant 0 : index
    %c0_4 = arith.constant 0 : index
    %c0_5 = arith.constant 0 : index
    %2 = vector.load %arg1[%c0_3, %c0_4, %c0_5] : memref<2x36x256xbf16, #tpu.memory_space<vmem>>, vector<1x36x256xbf16>
    %3 = vector.shape_cast %2 : vector<1x36x256xbf16> to vector<36x256xbf16>
    %cst = arith.constant dense<0.000000e+00> : vector<8x256xf32>
    %4 = tpu.matmul %0, %3, %cst {dimension_numbers = #tpu.dot_dimension_numbers<[1], [0], [0], [1], [0, 0, 1, 1], [], []>} : vector<8x36xbf16>, vector<36x256xbf16>, vector<8x256xf32> -> vector<8x256xf32>
    %5 = vector.broadcast %1 : vector<8x1xf32> to vector<8x256xf32>
    %6 = arith.addf %4, %5 : vector<8x256xf32>
    %cst_6 = arith.constant 0.000000e+00 : f32
    %7 = vector.broadcast %cst_6 : f32 to vector<8x256xf32>
    %8 = arith.maximumf %6, %7 : vector<8x256xf32>
    %c0_7 = arith.constant 0 : index
    %c0_8 = arith.constant 0 : index
    %c0_9 = arith.constant 0 : index
    %9 = vector.load %arg4[%c0_7, %c0_8, %c0_9] : memref<2x8x256xf32, #tpu.memory_space<vmem>>, vector<1x8x256xf32>
    %10 = vector.shape_cast %9 : vector<1x8x256xf32> to vector<8x256xf32>
    %11 = vector.shape_cast %8 : vector<8x256xf32> to vector<1x8x256xf32>
    tpu.vector_store %arg4[%c0_7, %c0_8, %c0_9], %11 {strides = array<i32>} : memref<2x8x256xf32, #tpu.memory_space<vmem>>, vector<1x8x256xf32>,
    %c1 = arith.constant 1 : index
    %c0_10 = arith.constant 0 : index
    %c0_11 = arith.constant 0 : index
    %12 = vector.load %arg1[%c1, %c0_10, %c0_11] : memref<2x36x256xbf16, #tpu.memory_space<vmem>>, vector<1x36x256xbf16>
    %13 = vector.shape_cast %12 : vector<1x36x256xbf16> to vector<36x256xbf16>
    %cst_12 = arith.constant dense<0.000000e+00> : vector<8x256xf32>
    %14 = tpu.matmul %0, %13, %cst_12 {dimension_numbers = #tpu.dot_dimension_numbers<[1], [0], [0], [1], [0, 0, 1, 1], [], []>} : vector<8x36xbf16>, vector<36x256xbf16>, vector<8x256xf32> -> vector<8x256xf32>
    %15 = vector.broadcast %1 : vector<8x1xf32> to vector<8x256xf32>
    %16 = arith.addf %14, %15 : vector<8x256xf32>
    %cst_13 = arith.constant 0.000000e+00 : f32
    %17 = vector.broadcast %cst_13 : f32 to vector<8x256xf32>
    %18 = arith.maximumf %16, %17 : vector<8x256xf32>
    %c1_14 = arith.constant 1 : index
    %c0_15 = arith.constant 0 : index
    %c0_16 = arith.constant 0 : index
    %19 = vector.load %arg4[%c1_14, %c0_15, %c0_16] : memref<2x8x256xf32, #tpu.memory_space<vmem>>, vector<1x8x256xf32>
    %20 = vector.shape_cast %19 : vector<1x8x256xf32> to vector<8x256xf32>
    %21 = vector.shape_cast %18 : vector<8x256xf32> to vector<1x8x256xf32>
    tpu.vector_store %arg4[%c1_14, %c0_15, %c0_16], %21 {strides = array<i32>} : memref<2x8x256xf32, #tpu.memory_space<vmem>>, vector<1x8x256xf32>,
    return
  }
  func.func @transform_0(%arg0: i32) -> (i32, i32, i32) {
    %c0_i32 = arith.constant 0 : i32
    %c0_i32_0 = arith.constant 0 : i32
    %c0_i32_1 = arith.constant 0 : i32
    return %arg0, %c0_i32, %c0_i32_0 : i32, i32, i32
  }
  func.func @transform_1(%arg0: i32) -> (i32, i32) {
    %c0_i32 = arith.constant 0 : i32
    %c0_i32_0 = arith.constant 0 : i32
    %c0_i32_1 = arith.constant 0 : i32
    return %c0_i32, %c0_i32_0 : i32, i32
  }
  func.func @transform_2(%arg0: i32) -> (i32, i32) {
    %c0_i32 = arith.constant 0 : i32
    %c0_i32_0 = arith.constant 0 : i32
    %c0_i32_1 = arith.constant 0 : i32
    return %c0_i32, %c0_i32_0 : i32, i32
  }
  func.func @transform_3(%arg0: i32) -> (i32, i32, i32) {
    %c0_i32 = arith.constant 0 : i32
    %c0_i32_0 = arith.constant 0 : i32
    %c0_i32_1 = arith.constant 0 : i32
    return %arg0, %c0_i32, %c0_i32_0 : i32, i32, i32
  }
}

</mosaic_0001>

<llo_original>
// kernel: tpu_custom_call.1
$region0: #{tpu_custom_call.1}
  #allocation0 [shape = 'u32[]', space=smem, size = 0x4, offset = 0x4, fixed_abs, tag = 'smem constant byte address 0x4 - core index']
  #allocation1 [shape = 'u32[72,128]{1,0:T(1,128)}', space=vmem, size = 0x9000, scoped, tag = 'internal scratch']
  %s0 = inlined_call_operand.vmem [shape: bf16[2,36,256], index: 0, kind: input, shape index: {}]
  %s1 = inlined_call_operand.vmem [shape: bf16[8,36], index: 1, kind: input, shape index: {}]
  %s2 = inlined_call_operand.vmem [shape: f32[8,1], index: 2, kind: input, shape index: {}]
  %s3 = inlined_call_operand.hbm [shape: f32[2,8,256], index: 3, kind: output, shape index: {}]
  %s4 = sld [smem:[#allocation0]]
  $region22: #{tpu_custom_call.1} parent=0
    _
  %s6 = ssub.s32 1, %s4
  %s7 = scalar_select 0, %s6, %s4
  $region1: #{tpu_custom_call.1} parent=0
    #allocation2 [shape = 'u8[16384]{0}', space=vmem, size = 0x4000, scoped, tag = 'output window, operand 0, single buffered']
    #allocation3 [shape = 's32[1]{0}', space=sflag, size = 0x4, scoped, tag = 'scoped memory for tpu_custom_call.1']
    %8 = vsyncpa [#allocation3], 0
    // Predicated region
    $region2: #{tpu_custom_call.1} parent=1 // pred_check
      _
    $region3: #{tpu_custom_call.1} parent=1 // pred_check_branch
      %10 = sbr.rel (0) target = $region5
    $region4: #{tpu_custom_call.1} parent=1 // pred_region
      _
    $region5: #{tpu_custom_call.1} parent=1 // pred_fallthru
      _
    // Predicated region
    $region6: #{tpu_custom_call.1} parent=1 // pred_check
      _
    $region7: #{tpu_custom_call.1} parent=1 // pred_check_branch
      %12 = sbr.rel (0) target = $region9
    $region8: #{tpu_custom_call.1} parent=1 // pred_region
      _
    $region9: #{tpu_custom_call.1} parent=1 // pred_fallthru
      _
    // Predicated region
    $region10: #{tpu_custom_call.1} parent=1 // pred_check
      _
    $region11: #{tpu_custom_call.1} parent=1 // pred_check_branch
      %14 = sbr.rel (0) target = $region13
    $region12: #{tpu_custom_call.1} parent=1 // pred_region
      _
    $region13: #{tpu_custom_call.1} parent=1 // pred_fallthru
      _
    %v16 = vld [vmem:[%s1] sm:$0xf]
    %v17 = vld [vmem:[%s2] sm:$0xff]
    %v18 = vld [vmem:[%s0] sm:$0xff]
    %v19 = vld [vmem:[%s0 + $0x8] sm:$0xff]
    %v20 = vld [vmem:[%s0 + $0x10] sm:$0xff]
    %v21 = vld [vmem:[%s0 + $0x18] sm:$0xff]
    %v22 = vld [vmem:[%s0 + $0x20] sm:$0x33]
    %24 = vset.pattern.permute.xlu0 0
    %25 = vperm.xlu0 %24, %v17
    %v26 = vpop.permute.xlu0 %25
    %v33 = vunpack.c.l.b16 %v18
    %v34 = vunpack.c.h.b16 %v18
    %v35 = vunpack.c.l.b16 %v19
    %v36 = vunpack.c.h.b16 %v19
    %v37 = vunpack.c.l.b16 %v20
    %v38 = vunpack.c.h.b16 %v20
    %v39 = vunpack.c.l.b16 %v21
    %v40 = vunpack.c.h.b16 %v21
    %v41 = vunpack.c.l.b16 %v22
    %v42 = vunpack.c.h.b16 %v22
    %v43 = vpack.c.b16 %v35, %v33
    %v44 = vpack.c.b16 %v36, %v34
    %v45 = vpack.c.b16 %v39, %v37
    %v46 = vpack.c.b16 %v40, %v38
    %v47 = vpack.c.b16 %v41, %v41
    %v48 = vpack.c.b16 %v42, %v42
    %vm53 = vcmask 293888
    %v55 = vsel %vm53, %v16, 0
    %vm57 = vcmask 1041408
    %v59 = vsel %vm57, %v47, 0
    %v62 = vsel %vm57, %v48, 0
    %64 = vmatpush.bf16.msra.mxu0 0
    %65 = vmatpush.bf16.msra.mxu0 0
    %66 = vmatpush.bf16.msra.mxu0 0
    %67 = vmatpush.bf16.msra.mxu0 0
    %68 = vmatpush.bf16.msra.mxu0 0
    %69 = vmatpush.bf16.msra.mxu0 %v59
    %70 = vmatpush.bf16.msra.mxu0 %v45
    %71 = vmatpush.bf16.msra.mxu0 %v43
    %72 = vmatmul.bf16.gmra.mxu0 %v55
    %v73 = vpop.f32.mrf.mxu0
    %v74 = vadd.f32 %v26, %v73
    %v75 = vpop.f32.mrf.mxu0
    %76 = vdwg.mxu0
    %77 = vmatpush.bf16.msra.mxu0 0
    %78 = vmatpush.bf16.msra.mxu0 0
    %79 = vmatpush.bf16.msra.mxu0 0
    %80 = vmatpush.bf16.msra.mxu0 0
    %81 = vmatpush.bf16.msra.mxu0 0
    %82 = vmatpush.bf16.msra.mxu0 %v62
    %83 = vmatpush.bf16.msra.mxu0 %v46
    %84 = vmatpush.bf16.msra.mxu0 %v44
    %85 = vmatmul.bf16.gmra.mxu0 %v55
    %v86 = vpop.f32.mrf.mxu0
    %v87 = vadd.f32 %v26, %v86
    %v88 = vpop.f32.mrf.mxu0
    %89 = vdwg.mxu0
    %v90 = vmax.f32 %v74, 0.0
    %v91 = vmax.f32 %v87, 0.0
    %92 = vst [vmem:[#allocation2] sm:$0xff] %v90
    %93 = vst [vmem:[#allocation2 + $0x8] sm:$0xff] %v91
    %s94 = scalar_lea.vmem %s0, 40
    %v95 = vld [vmem:[%s94] sm:$0xff]
    %v96 = vld [vmem:[%s94 + $0x8] sm:$0xff]
    %v97 = vld [vmem:[%s94 + $0x10] sm:$0xff]
    %v98 = vld [vmem:[%s94 + $0x18] sm:$0xff]
    %v99 = vld [vmem:[%s94 + $0x20] sm:$0x33]
    %v105 = vunpack.c.l.b16 %v95
    %v106 = vunpack.c.h.b16 %v95
    %v107 = vunpack.c.l.b16 %v96
    %v108 = vunpack.c.h.b16 %v96
    %v109 = vunpack.c.l.b16 %v97
    %v110 = vunpack.c.h.b16 %v97
    %v111 = vunpack.c.l.b16 %v98
    %v112 = vunpack.c.h.b16 %v98
    %v113 = vunpack.c.l.b16 %v99
    %v114 = vunpack.c.h.b16 %v99
    %v115 = vpack.c.b16 %v107, %v105
    %v116 = vpack.c.b16 %v108, %v106
    %v117 = vpack.c.b16 %v111, %v109
    %v118 = vpack.c.b16 %v112, %v110
    %v119 = vpack.c.b16 %v113, %v113
    %v120 = vpack.c.b16 %v114, %v114
    %v126 = vsel %vm57, %v119, 0
    %v129 = vsel %vm57, %v120, 0
    %131 = vmatpush.bf16.msra.mxu0 0
    %132 = vmatpush.bf16.msra.mxu0 0
    %133 = vmatpush.bf16.msra.mxu0 0
    %134 = vmatpush.bf16.msra.mxu0 0
    %135 = vmatpush.bf16.msra.mxu0 0
    %136 = vmatpush.bf16.msra.mxu0 %v126
    %137 = vmatpush.bf16.msra.mxu0 %v117
    %138 = vmatpush.bf16.msra.mxu0 %v115
    %139 = vmatmul.bf16.gmra.mxu0 %v55
    %v140 = vpop.f32.mrf.mxu0
    %v141 = vadd.f32 %v26, %v140
    %v142 = vpop.f32.mrf.mxu0
    %143 = vdwg.mxu0
    %144 = vmatpush.bf16.msra.mxu0 0
    %145 = vmatpush.bf16.msra.mxu0 0
    %146 = vmatpush.bf16.msra.mxu0 0
    %147 = vmatpush.bf16.msra.mxu0 0
    %148 = vmatpush.bf16.msra.mxu0 0
    %149 = vmatpush.bf16.msra.mxu0 %v129
    %150 = vmatpush.bf16.msra.mxu0 %v118
    %151 = vmatpush.bf16.msra.mxu0 %v116
    %152 = vmatmul.bf16.gmra.mxu0 %v55
    %v153 = vpop.f32.mrf.mxu0
    %v154 = vadd.f32 %v26, %v153
    %v155 = vpop.f32.mrf.mxu0
    %156 = vdwg.mxu0
    %v157 = vmax.f32 %v141, 0.0
    %v158 = vmax.f32 %v154, 0.0
    %s159 = scalar_lea.vmem [#allocation2], 16
    %160 = vst [vmem:[%s159] sm:$0xff] %v157
    %161 = vst [vmem:[%s159 + $0x8] sm:$0xff] %v158
    // Predicated region
    $region14: #{tpu_custom_call.1} parent=1 // pred_check
      _
    $region15: #{tpu_custom_call.1} parent=1 // pred_check_branch
      %163 = sbr.rel (0) target = $region17
    $region16: #{tpu_custom_call.1} parent=1 // pred_region
      %165 = vsyncadd [#allocation3], 0
      %s166 = sshll.u32 [#allocation2], 4
      %s167 = int_to_ptr.vmem [resolvable:$true] %s166
      %s168 = sshll.u32 %s3, 4
      %s169 = int_to_ptr.hbm [resolvable:$true] %s168
      %174 = dma.vmem_to_hbm [thread:$0]  %s167, 512, %s169, [#allocation3], 256, 256, 16
    $region17: #{tpu_custom_call.1} parent=1 // pred_fallthru
      _
    // Predicated region
    $region18: #{tpu_custom_call.1} parent=1 // pred_check
      _
    $region19: #{tpu_custom_call.1} parent=1 // pred_check_branch
      %176 = sbr.rel (0) target = $region21
    $region20: #{tpu_custom_call.1} parent=1 // pred_region
      %178 = dma.done [#allocation3], 512
    $region21: #{tpu_custom_call.1} parent=1 // pred_fallthru
      _
    %179 = vsyncpa [#allocation3], 1

</llo_original>
